<compile_context>
chip_gen: v6e
topology: v6e:2x2x1
jax: 0.10.0
libtpu: 0.0.40
codegen_flags: <defaults>
</compile_context>

<pallas_src>
import functools
from typing import List, Sequence, Tuple

import jax
import jax.numpy as jnp
import numpy as np
from jax.experimental import pallas as pl
from jax.experimental.pallas import tpu as pltpu


# ---------------------------------------------------------------------------
# Plain-JAX glue: base ("cell") anchor generation
# (matches AnchorGenerator.generate_anchors)
# ---------------------------------------------------------------------------
def generate_cell_anchors(scales: Sequence[int],
                          aspect_ratios: Sequence[float]) -> jnp.ndarray:
    scales_t = jnp.asarray(scales, dtype=jnp.float32)
    ar_t = jnp.asarray(aspect_ratios, dtype=jnp.float32)
    h_ratios = jnp.sqrt(ar_t)
    w_ratios = 1.0 / h_ratios
    w_scales = (w_ratios[:, None] * scales_t[None, :]).reshape(-1)
    h_scales = (h_ratios[:, None] * scales_t[None, :]).reshape(-1)
    base = jnp.stack([-w_scales, -h_scales, w_scales, h_scales], axis=1) / 2.0
    return jnp.round(base)  # (A, 4) float32, integer-valued


# ---------------------------------------------------------------------------
# Pallas kernel: one row-tile of the (H, W*4*A) anchor slab.
#   out[r, c] = xbase[0, c] + (row0 + r) * yrow[0, c]
# where xbase already contains base anchors + x-shift (x-columns) and yrow is
# stride_h at y-columns (0 at x-columns).  One mul + one add per element.
# ---------------------------------------------------------------------------
def _grid_anchor_kernel(xbase_ref, yrow_ref, out_ref, *, tile_h: int):
    th, cols = out_ref.shape  # (tile_h, W*4*A)
    row0 = pl.program_id(0) * tile_h
    y = (jax.lax.broadcasted_iota(jnp.int32, (th, cols), 0) + row0)
    out_ref[...] = xbase_ref[...] + y.astype(jnp.float32) * yrow_ref[...]


_PALLAS_MIN_ELEMS = 4096          # below this, plain JAX beats a kernel launch
_TARGET_TILE_BYTES = 1 << 20      # ~1 MiB output tile -> good DMA overlap


def grid_anchors_one_level(base_anchors: jnp.ndarray,
                           grid_size: Tuple[int, int],
                           stride: Tuple[int, int]) -> jnp.ndarray:
    """Returns (H*W*A, 4) float32 anchors for one feature level."""
    grid_h, grid_w = int(grid_size[0]), int(grid_size[1])
    stride_h, stride_w = int(stride[0]), int(stride[1])
    num_a = int(base_anchors.shape[0])
    cols = grid_w * 4 * num_a

    # Static per-level precompute (plain JAX): a lane-dense row holding the
    # base anchors already offset by the per-column x-shift, and a row holding
    # stride_h at the y-columns.  Both are exact integer-valued float32.
    x_shift = jnp.arange(grid_w, dtype=jnp.float32) * float(stride_w)          # (W,)
    xmask = jnp.array([1.0, 0.0, 1.0, 0.0], jnp.float32)                       # x0,y0,x1,y1
    xbase = (base_anchors[None, :, :]
             + x_shift[:, None, None] * xmask[None, None, :]).reshape(1, cols)  # (1, W*4A)
    yrow = jnp.tile(jnp.array([0.0, float(stride_h), 0.0, float(stride_h)],
                              jnp.float32), grid_w * num_a).reshape(1, cols)

    if grid_h * cols < _PALLAS_MIN_ELEMS:
        # Tiny upper-pyramid level: launch overhead dominates -> plain JAX.
        y_idx = jnp.arange(grid_h, dtype=jnp.float32)[:, None]                  # (H, 1)
        out = xbase + y_idx * yrow                                              # (H, W*4A)
        return out.reshape(grid_h * grid_w * num_a, 4)

    # Row-tile so each output block is ~1 MiB (rows a multiple of 8, or full H).
    row_bytes = cols * 4
    tile_h = max(8, (_TARGET_TILE_BYTES // row_bytes) // 8 * 8)
    if tile_h > grid_h:
        tile_h = grid_h

    kernel = functools.partial(_grid_anchor_kernel, tile_h=tile_h)
    out = pl.pallas_call(
        kernel,
        out_shape=jax.ShapeDtypeStruct((grid_h, cols), jnp.float32),
        grid=(pl.cdiv(grid_h, tile_h),),
        in_specs=[pl.BlockSpec((1, cols), lambda i: (0, 0)),
                  pl.BlockSpec((1, cols), lambda i: (0, 0))],
        out_specs=pl.BlockSpec((tile_h, cols), lambda i: (i, 0)),
        compiler_params=pltpu.CompilerParams(
            dimension_semantics=("parallel",)),   # v7x: shard tiles over 2 TCs
    )(xbase, yrow)

    # (H, W*4*A) -> (H*W*A, 4); row-major order matches torch's
    # (shifts[:, None, :] + base[None, :, :]).reshape(-1, 4).
    return out.reshape(grid_h * grid_w * num_a, 4)


# ---------------------------------------------------------------------------
# AnchorGenerator equivalent
# ---------------------------------------------------------------------------
class AnchorGeneratorPallas:
    def __init__(self,
                 sizes: Tuple[Tuple[int, ...], ...] = ((128, 256, 512),),
                 aspect_ratios: Tuple[Tuple[float, ...], ...] = ((0.5, 1.0, 2.0),)):
        assert isinstance(sizes[0], (list, tuple))
        assert isinstance(aspect_ratios[0], (list, tuple))
        assert len(sizes) == len(aspect_ratios)
        self.sizes = sizes
        self.aspect_ratios = aspect_ratios
        # deterministic parameter construction (no checkpoint load)
        self.cell_anchors = [generate_cell_anchors(s, a)
                             for s, a in zip(sizes, aspect_ratios)]

    def num_anchors_per_location(self) -> List[int]:
        return [len(s) * len(a) for s, a in zip(self.sizes, self.aspect_ratios)]

    def __call__(self, image_tensors: jnp.ndarray,
                 image_sizes: List[Tuple[int, int]],
                 feature_maps: List[jnp.ndarray]) -> List[jnp.ndarray]:
        grid_sizes = [fm.shape[-2:] for fm in feature_maps]
        image_size = image_tensors.shape[-2:]
        if not len(grid_sizes) == len(self.cell_anchors):
            raise ValueError("number of feature maps must match sizes/aspect_ratios")
        strides = [(image_size[0] // g[0], image_size[1] // g[1]) for g in grid_sizes]

        anchors_over_all_feature_maps = [
            grid_anchors_one_level(base, g, s)
            for base, g, s in zip(self.cell_anchors, grid_sizes, strides)
        ]
        per_image = jnp.concatenate(anchors_over_all_feature_maps, axis=0)
        # One (identical, immutable) anchor tensor per image in the batch;
        # numerically equivalent to torch's per-image torch.cat.
        return [per_image for _ in range(len(image_sizes))]


# ---------------------------------------------------------------------------
# Pure-numpy reference (mirrors the PyTorch code) for a correctness check
# ---------------------------------------------------------------------------
def _reference_anchors(sizes, aspect_ratios, image_size, grid_sizes):
    outs = []
    for (s, a, g) in zip(sizes, aspect_ratios, grid_sizes):
        scales = np.asarray(s, np.float32)
        ar = np.asarray(a, np.float32)
        hr = np.sqrt(ar)
        wr = 1.0 / hr
        ws = (wr[:, None] * scales[None, :]).reshape(-1)
        hs = (hr[:, None] * scales[None, :]).reshape(-1)
        base = np.round(np.stack([-ws, -hs, ws, hs], axis=1) / 2.0)
        gh, gw = g
        sh, sw = image_size[0] // gh, image_size[1] // gw
        shifts_x = np.arange(0, gw, dtype=np.int64) * sw
        shifts_y = np.arange(0, gh, dtype=np.int64) * sh
        sy, sx = np.meshgrid(shifts_y, shifts_x, indexing="ij")
        sx = sx.reshape(-1)
        sy = sy.reshape(-1)
        shifts = np.stack([sx, sy, sx, sy], axis=1).astype(np.float32)
        outs.append((shifts[:, None, :] + base[None, :, :]).reshape(-1, 4))
    return np.concatenate(outs, axis=0)


if __name__ == "__main__":
    key = jax.random.PRNGKey(0)
    k1, k2, k3 = jax.random.split(key, 3)

    # Small shapes consistent with the module's forward:
    # images NCHW (2, 3, 32, 32); two FPN-style feature maps NCHW.
    batch = 2
    image_tensors = jax.random.normal(k1, (batch, 3, 32, 32), jnp.float32)
    image_sizes = [(30, 32), (32, 30)]  # original (pre-padding) sizes
    feature_maps = [
        jax.random.normal(k2, (batch, 4, 16, 16), jnp.float32),  # Pallas path
        jax.random.normal(k3, (batch, 4, 8, 8), jnp.float32),    # tiny -> plain JAX
    ]

    sizes = ((16, 32), (32, 64))
    aspect_ratios = ((0.5, 1.0, 2.0), (0.5, 1.0, 2.0))

    gen = AnchorGeneratorPallas(sizes=sizes, aspect_ratios=aspect_ratios)
    anchors_out = gen(image_tensors, image_sizes, feature_maps)
    anchors_out = [jax.block_until_ready(a) for a in anchors_out]

    # verify against reference semantics (exact: all values are small integers in f32)
    ref = _reference_anchors(sizes, aspect_ratios,
                             image_tensors.shape[-2:],
                             [fm.shape[-2:] for fm in feature_maps])
    assert len(anchors_out) == batch
    for a in anchors_out:
        assert a.shape == ref.shape, (a.shape, ref.shape)
        np.testing.assert_allclose(np.asarray(a), ref, rtol=0, atol=0)

    print("KERNEL_OK")
</pallas_src>

<mosaic_0001>
module attributes {stable_mosaic.version = 11 : i64} {
  func.func @_grid_anchor_kernel(%arg0: i32, %arg1: memref<1x384xf32, #tpu.memory_space<vmem>>, %arg2: memref<1x384xf32, #tpu.memory_space<vmem>>, %arg3: memref<16x384xf32, #tpu.memory_space<vmem>>) attributes {dimension_semantics = [#tpu.dimension_semantics<parallel>], iteration_bounds = array<i64: 1>, scalar_prefetch = 0 : i64, scratch_operands = 0 : i64, tpu.core_type = #tpu.core_type<tc>, window_params = [{pipeline_mode = #tpu.pipeline_mode<synchronous>, transform_indices = @transform_0, window_bounds = array<i64: 1, 384>}, {pipeline_mode = #tpu.pipeline_mode<synchronous>, transform_indices = @transform_1, window_bounds = array<i64: 1, 384>}, {transform_indices = @transform_2, window_bounds = array<i64: 16, 384>}]} {
    %c16_i32 = arith.constant 16 : i32
    %0 = arith.muli %arg0, %c16_i32 : i32
    %1 = tpu.iota {dimensions = array<i32: 0>} : vector<16x384xi32>
    %2 = vector.broadcast %0 : i32 to vector<16x384xi32>
    %3 = arith.addi %1, %2 : vector<16x384xi32>
    %c0 = arith.constant 0 : index
    %c0_0 = arith.constant 0 : index
    %4 = vector.load %arg1[%c0, %c0_0] : memref<1x384xf32, #tpu.memory_space<vmem>>, vector<1x384xf32>
    %5 = arith.sitofp %3 : vector<16x384xi32> to vector<16x384xf32>
    %c0_1 = arith.constant 0 : index
    %c0_2 = arith.constant 0 : index
    %6 = vector.load %arg2[%c0_1, %c0_2] : memref<1x384xf32, #tpu.memory_space<vmem>>, vector<1x384xf32>
    %7 = vector.broadcast %6 : vector<1x384xf32> to vector<16x384xf32>
    %8 = arith.mulf %5, %7 : vector<16x384xf32>
    %9 = vector.broadcast %4 : vector<1x384xf32> to vector<16x384xf32>
    %10 = arith.addf %9, %8 : vector<16x384xf32>
    %c0_3 = arith.constant 0 : index
    %c0_4 = arith.constant 0 : index
    %11 = vector.load %arg3[%c0_3, %c0_4] : memref<16x384xf32, #tpu.memory_space<vmem>>, vector<16x384xf32>
    tpu.vector_store %arg3[%c0_3, %c0_4], %10 {strides = array<i32>} : memref<16x384xf32, #tpu.memory_space<vmem>>, vector<16x384xf32>,
    return
  }
  func.func @transform_0(%arg0: i32) -> (i32, i32) {
    %c0_i32 = arith.constant 0 : i32
    %c0_i32_0 = arith.constant 0 : i32
    %c0_i32_1 = arith.constant 0 : i32
    return %c0_i32, %c0_i32_0 : i32, i32
  }
  func.func @transform_1(%arg0: i32) -> (i32, i32) {
    %c0_i32 = arith.constant 0 : i32
    %c0_i32_0 = arith.constant 0 : i32
    %c0_i32_1 = arith.constant 0 : i32
    return %c0_i32, %c0_i32_0 : i32, i32
  }
  func.func @transform_2(%arg0: i32) -> (i32, i32) {
    %c0_i32 = arith.constant 0 : i32
    %c0_i32_0 = arith.constant 0 : i32
    return %arg0, %c0_i32 : i32, i32
  }
}

</mosaic_0001>

<llo_original>
// kernel: tpu_custom_call.1
$region0: #{tpu_custom_call.1}
  #allocation0 [shape = 'u32[]', space=smem, size = 0x4, offset = 0x4, fixed_abs, tag = 'smem constant byte address 0x4 - core index']
  #allocation1 [shape = 'u32[144,128]{1,0:T(1,128)}', space=vmem, size = 0x12000, scoped, tag = 'internal scratch']
  %s0 = inlined_call_operand.hbm [shape: f32[1,384], index: 0, kind: input, shape index: {}]
  %s1 = inlined_call_operand.hbm [shape: f32[1,384], index: 1, kind: input, shape index: {}]
  %s2 = inlined_call_operand.hbm [shape: f32[16,384], index: 2, kind: output, shape index: {}]
  %s3 = sld [smem:[#allocation0]]
  $region26: #{tpu_custom_call.1} parent=0
    _
  %s5 = ssub.s32 1, %s3
  %s6 = scalar_select 0, %s5, %s3
  $region1: #{tpu_custom_call.1} parent=0
    #allocation2 [shape = 'u8[1536]{0}', space=vmem, size = 0x800, scoped, tag = 'input window, operand 0, single buffered']
    #allocation3 [shape = 's32[1]{0}', space=sflag, size = 0x4, scoped, tag = 'scoped memory for tpu_custom_call.1']
    #allocation4 [shape = 's32[1]{0}', space=sflag, size = 0x4, scoped, tag = 'scoped memory for tpu_custom_call.1']
    #allocation5 [shape = 'u8[1536]{0}', space=vmem, size = 0x800, scoped, tag = 'input window, operand 1, single buffered']
    #allocation6 [shape = 's32[1]{0}', space=sflag, size = 0x4, scoped, tag = 'scoped memory for tpu_custom_call.1']
    #allocation7 [shape = 'u8[24576]{0}', space=vmem, size = 0x6000, scoped, tag = 'output window, operand 0, single buffered']
    %7 = vsyncpa [#allocation3], 0
    %8 = vsyncpa [#allocation6], 0
    %9 = vsyncpa [#allocation4], 0
    // Predicated region
    $region2: #{tpu_custom_call.1} parent=1 // pred_check
      _
    $region3: #{tpu_custom_call.1} parent=1 // pred_check_branch
      %11 = sbr.rel (0) target = $region5
    $region4: #{tpu_custom_call.1} parent=1 // pred_region
      %s13 = ssub.s32 48, 48
      %14 = vsyncadd [#allocation3], %s13
      %s16 = sshll.u32 [#allocation2], 4
      %s17 = int_to_ptr.vmem [resolvable:$true] %s16
      %19 = dma.hbm_to_vmem [thread:$0]  %s0, 48, %s17, [#allocation3]
    $region5: #{tpu_custom_call.1} parent=1 // pred_fallthru
      _
    // Predicated region
    $region6: #{tpu_custom_call.1} parent=1 // pred_check
      _
    $region7: #{tpu_custom_call.1} parent=1 // pred_check_branch
      %21 = sbr.rel (0) target = $region9
    $region8: #{tpu_custom_call.1} parent=1 // pred_region
      %s23 = ssub.s32 48, 48
      %24 = vsyncadd [#allocation6], %s23
      %s26 = sshll.u32 [#allocation5], 4
      %s27 = int_to_ptr.vmem [resolvable:$true] %s26
      %29 = dma.hbm_to_vmem [thread:$0]  %s1, 48, %s27, [#allocation6]
    $region9: #{tpu_custom_call.1} parent=1 // pred_fallthru
      _
    // Predicated region
    $region10: #{tpu_custom_call.1} parent=1 // pred_check
      _
    $region11: #{tpu_custom_call.1} parent=1 // pred_check_branch
      %31 = sbr.rel (0) target = $region13
    $region12: #{tpu_custom_call.1} parent=1 // pred_region
      %32 = dma.done [#allocation3], 48
    $region13: #{tpu_custom_call.1} parent=1 // pred_fallthru
      _
    // Predicated region
    $region14: #{tpu_custom_call.1} parent=1 // pred_check
      _
    $region15: #{tpu_custom_call.1} parent=1 // pred_check_branch
      %34 = sbr.rel (0) target = $region17
    $region16: #{tpu_custom_call.1} parent=1 // pred_region
      %35 = dma.done [#allocation6], 48
    $region17: #{tpu_custom_call.1} parent=1 // pred_fallthru
      _
    %s36 = smul.u32 0, 16
    %v37 = vlaneseq
    %v38 = vshrl.u32 %v37, 7
    %v39 = vadd.s32 %v38, 8
    %v40 = vstv %s36
    %v41 = vadd.s32 %v38, %v40
    %v42 = vadd.s32 %v39, %v40
    %v43 = vld [vmem:[#allocation2] sm:$0x7]
    %v44 = vcvt.s32.f32 %v41
    %v45 = vcvt.s32.f32 %v42
    %v46 = vld [vmem:[#allocation5] sm:$0x7]
    %v48 = vlaneseq
    %v49 = vshrl.u32 %v48, 7
    %v50 = vsub.s32 0, %v49
    %v51 = vrot.slane %v46, %v50
    %v52 = vlaneseq
    %v53 = vshrl.u32 %v52, 7
    %v54 = vsub.s32 1, %v53
    %v55 = vrot.slane %v46, %v54
    %v56 = vlaneseq
    %v57 = vshrl.u32 %v56, 7
    %v58 = vsub.s32 2, %v57
    %v59 = vrot.slane %v46, %v58
    %v63 = vmul.f32 %v44, %v51
    %v64 = vmul.f32 %v44, %v55
    %v65 = vmul.f32 %v44, %v59
    %v66 = vmul.f32 %v45, %v51
    %v67 = vmul.f32 %v45, %v55
    %v68 = vmul.f32 %v45, %v59
    %v70 = vlaneseq
    %v71 = vshrl.u32 %v70, 7
    %v72 = vsub.s32 0, %v71
    %v73 = vrot.slane %v43, %v72
    %v74 = vlaneseq
    %v75 = vshrl.u32 %v74, 7
    %v76 = vsub.s32 1, %v75
    %v77 = vrot.slane %v43, %v76
    %v78 = vlaneseq
    %v79 = vshrl.u32 %v78, 7
    %v80 = vsub.s32 2, %v79
    %v81 = vrot.slane %v43, %v80
    %v85 = vadd.f32 %v73, %v63
    %v86 = vadd.f32 %v77, %v64
    %v87 = vadd.f32 %v81, %v65
    %v88 = vadd.f32 %v73, %v66
    %v89 = vadd.f32 %v77, %v67
    %v90 = vadd.f32 %v81, %v68
    %91 = vst [vmem:[#allocation7] sm:$0xff] %v85
    %92 = vst [vmem:[#allocation7 + $0x8] sm:$0xff] %v86
    %93 = vst [vmem:[#allocation7 + $0x10] sm:$0xff] %v87
    %94 = vst [vmem:[#allocation7 + $0x18] sm:$0xff] %v88
    %95 = vst [vmem:[#allocation7 + $0x20] sm:$0xff] %v89
    %96 = vst [vmem:[#allocation7 + $0x28] sm:$0xff] %v90
    // Predicated region
    $region18: #{tpu_custom_call.1} parent=1 // pred_check
      _
    $region19: #{tpu_custom_call.1} parent=1 // pred_check_branch
      %98 = sbr.rel (0) target = $region21
    $region20: #{tpu_custom_call.1} parent=1 // pred_region
      %s100 = ssub.s32 768, 768
      %101 = vsyncadd [#allocation4], %s100
      %s102 = sshll.u32 [#allocation7], 4
      %s103 = int_to_ptr.vmem [resolvable:$true] %s102
      %108 = dma.vmem_to_hbm [thread:$0]  %s103, 768, %s2, [#allocation4], 384, 384, 24
    $region21: #{tpu_custom_call.1} parent=1 // pred_fallthru
      _
    // Predicated region
    $region22: #{tpu_custom_call.1} parent=1 // pred_check
      _
    $region23: #{tpu_custom_call.1} parent=1 // pred_check_branch
      %110 = sbr.rel (0) target = $region25
    $region24: #{tpu_custom_call.1} parent=1 // pred_region
      %111 = dma.done [#allocation4], 768
    $region25: #{tpu_custom_call.1} parent=1 // pred_fallthru
      _
    %112 = vsyncpa [#allocation3], 1
    %113 = vsyncpa [#allocation6], 1
    %114 = vsyncpa [#allocation4], 1

</llo_original>
